<compile_context>
chip_gen: v7x
topology: tpu7x:2x2x1
jax: 0.10.0
libtpu: 0.0.40
codegen_flags: <defaults>
</compile_context>

<pallas_src>
import jax
import jax.numpy as jnp
from jax.experimental import pallas as pl
from jax.experimental.pallas import tpu as pltpu


def simplenet_kernel(s_t_ref, a_t_ref, p_ref, o_ref):
    """out = sum_t(s_t) . w_s + a @ w_a + c, fully on VPU/XLU (no MXU).

    s_t_ref: (S, seq_len)   state sequence, transposed
    a_t_ref: (A, N)         actions, transposed
    p_ref:   (S+A+1, 1)     packed fused params [w_s; w_a; c]
    o_ref:   (1, N)         lane-dense output row
    """
    S = s_t_ref.shape[0]
    A = a_t_ref.shape[0]

    w_s = p_ref[0:S, :]              # (S, 1)
    w_a = p_ref[S:S + A, :]          # (A, 1)
    c = p_ref[S + A:S + A + 1, :]    # (1, 1)

    # h . w_s with h = sum_t s[t]  ==  sum over (i, t) of s_t[i, t] * w_s[i]
    term_s = jnp.sum(s_t_ref[...] * w_s, axis=1, keepdims=True)    # (S, 1) lane reduce
    term_s = jnp.sum(term_s, axis=0, keepdims=True)                # (1, 1) sublane reduce

    # a @ w_a computed as a sublane reduction -> result is already lane-dense (1, N)
    term_a = jnp.sum(a_t_ref[...] * w_a, axis=0, keepdims=True)    # (1, N)

    o_ref[...] = (term_a + term_s + c).astype(o_ref.dtype)


def fuse_params(params, state_size):
    """Collapse Linear(S+A,H) -> Linear(H,1) into one affine map and pack it.

    Valid only because n_layers=1 (no ReLU between the two Linears).
    Returns an (S+A+1, 1) f32 slab: rows [0:S)=w_s, [S:S+A)=w_a, [S+A]=c.
    """
    w1, b1 = params["w1"], params["b1"]        # (H, S+A), (H,)
    w2, b2 = params["w2"], params["b2"]        # (1, H),   (1,)
    w_fused = (w2 @ w1).T                      # (S+A, 1)
    c = (w2 @ b1 + b2).reshape(1, 1)           # (1, 1)
    return jnp.concatenate(
        [w_fused[:state_size], w_fused[state_size:], c], axis=0
    ).astype(jnp.float32)


@jax.jit
def simplenet_forward(s, a, fused_p):
    n = a.shape[0]
    # Layout plumbing only (done by XLA): transposed operands give sublane
    # contractions and a lane-dense (1, N) output slab inside the kernel.
    s_t = jnp.transpose(s)   # (S, seq_len)
    a_t = jnp.transpose(a)   # (A, N)
    out_row = pl.pallas_call(
        simplenet_kernel,
        out_shape=jax.ShapeDtypeStruct((1, n), jnp.float32),
        in_specs=[pl.BlockSpec(memory_space=pltpu.MemorySpace.VMEM)] * 3,
        out_specs=pl.BlockSpec(memory_space=pltpu.MemorySpace.VMEM),
    )(s_t, a_t, fused_p)
    return out_row.reshape(n, 1)


def init_params(key, state_size, action_size, hidden_size):
    """Deterministic PyTorch-style (uniform +/- 1/sqrt(fan_in)) init."""
    k1, k2, k3, k4 = jax.random.split(key, 4)
    in1 = state_size + action_size
    bound1 = 1.0 / jnp.sqrt(in1)
    bound2 = 1.0 / jnp.sqrt(hidden_size)
    return {
        "w1": jax.random.uniform(k1, (hidden_size, in1), jnp.float32, -bound1, bound1),
        "b1": jax.random.uniform(k2, (hidden_size,), jnp.float32, -bound1, bound1),
        "w2": jax.random.uniform(k3, (1, hidden_size), jnp.float32, -bound2, bound2),
        "b2": jax.random.uniform(k4, (1,), jnp.float32, -bound2, bound2),
    }


def simplenet_ref(s, a, params):
    """Pure-JAX reference mirroring the PyTorch forward exactly (unfused)."""
    h = jnp.sum(s[:, None, :], axis=0)                                   # (1, S)
    x = jnp.concatenate([jnp.broadcast_to(h, (a.shape[0], h.shape[1])), a], axis=1)
    y = x @ params["w1"].T + params["b1"]
    return y @ params["w2"].T + params["b2"]


if __name__ == "__main__":
    state_size = 16
    action_size = 16
    hidden_size = 32
    seq_len = 8
    n_actions = 8

    key = jax.random.PRNGKey(0)
    k_s, k_a, k_p = jax.random.split(key, 3)
    s = jax.random.normal(k_s, (seq_len, state_size), jnp.float32)
    a = jax.random.normal(k_a, (n_actions, action_size), jnp.float32)
    params = init_params(k_p, state_size, action_size, hidden_size)
    fused_p = fuse_params(params, state_size)   # one-time parameter prep

    out = simplenet_forward(s, a, fused_p)
    jax.block_until_ready(out)

    ref = simplenet_ref(s, a, params)
    assert out.shape == (n_actions, 1)
    assert jnp.allclose(out, ref, atol=1e-4, rtol=1e-4)
    print("KERNEL_OK")
</pallas_src>

<mosaic_0001>
module attributes {stable_mosaic.version = 11 : i64} {
  func.func @simplenet_kernel(%arg0: memref<16x8xf32, #tpu.memory_space<vmem>>, %arg1: memref<16x8xf32, #tpu.memory_space<vmem>>, %arg2: memref<33x1xf32, #tpu.memory_space<vmem>>, %arg3: memref<1x8xf32, #tpu.memory_space<vmem>>) attributes {dimension_semantics = [], scalar_prefetch = 0 : i64, scratch_operands = 0 : i64, tpu.core_type = #tpu.core_type<tc>} {
    %c0 = arith.constant 0 : index
    %c0_0 = arith.constant 0 : index
    %0 = vector.load %arg2[%c0, %c0_0] : memref<33x1xf32, #tpu.memory_space<vmem>>, vector<16x1xf32>
    %c16 = arith.constant 16 : index
    %c0_1 = arith.constant 0 : index
    %1 = vector.load %arg2[%c16, %c0_1] : memref<33x1xf32, #tpu.memory_space<vmem>>, vector<16x1xf32>
    %c32 = arith.constant 32 : index
    %c0_2 = arith.constant 0 : index
    %2 = vector.load %arg2[%c32, %c0_2] : memref<33x1xf32, #tpu.memory_space<vmem>>, vector<1x1xf32>
    %c0_3 = arith.constant 0 : index
    %c0_4 = arith.constant 0 : index
    %3 = vector.load %arg0[%c0_3, %c0_4] : memref<16x8xf32, #tpu.memory_space<vmem>>, vector<16x8xf32>
    %4 = vector.broadcast %0 : vector<16x1xf32> to vector<16x8xf32>
    %5 = arith.mulf %3, %4 : vector<16x8xf32>
    %cst = arith.constant dense<0.000000e+00> : vector<16xf32>
    %6 = vector.multi_reduction <add>, %5, %cst [1] : vector<16x8xf32> to vector<16xf32>
    %7 = vector.shape_cast %6 : vector<16xf32> to vector<16x1xf32>
    %cst_5 = arith.constant dense<0.000000e+00> : vector<1xf32>
    %8 = vector.multi_reduction <add>, %7, %cst_5 [0] : vector<16x1xf32> to vector<1xf32>
    %9 = vector.shape_cast %8 : vector<1xf32> to vector<1x1xf32>
    %c0_6 = arith.constant 0 : index
    %c0_7 = arith.constant 0 : index
    %10 = vector.load %arg1[%c0_6, %c0_7] : memref<16x8xf32, #tpu.memory_space<vmem>>, vector<16x8xf32>
    %11 = vector.broadcast %1 : vector<16x1xf32> to vector<16x8xf32>
    %12 = arith.mulf %10, %11 : vector<16x8xf32>
    %cst_8 = arith.constant dense<0.000000e+00> : vector<8xf32>
    %13 = vector.multi_reduction <add>, %12, %cst_8 [0] : vector<16x8xf32> to vector<8xf32>
    %14 = vector.shape_cast %13 : vector<8xf32> to vector<1x8xf32>
    %15 = vector.broadcast %9 : vector<1x1xf32> to vector<1x8xf32>
    %16 = arith.addf %14, %15 : vector<1x8xf32>
    %17 = vector.broadcast %2 : vector<1x1xf32> to vector<1x8xf32>
    %18 = arith.addf %16, %17 : vector<1x8xf32>
    %c0_9 = arith.constant 0 : index
    %c0_10 = arith.constant 0 : index
    %19 = vector.load %arg3[%c0_9, %c0_10] : memref<1x8xf32, #tpu.memory_space<vmem>>, vector<1x8xf32>
    tpu.vector_store %arg3[%c0_9, %c0_10], %18 {strides = array<i32>} : memref<1x8xf32, #tpu.memory_space<vmem>>, vector<1x8xf32>,
    return
  }
}

</mosaic_0001>

<llo_original>
// kernel: simplenet_forward.1
$region0: #{simplenet_forward.1}
  #allocation0 [shape = 'u32[]', space=smem, size = 0x4, offset = 0x4, fixed_abs, tag = 'smem constant byte address 0x4 - core index']
  #allocation1 [shape = 'u32[144,128]{1,0:T(1,128)}', space=vmem, size = 0x12000, scoped, tag = 'internal scratch']
  %s0 = inlined_call_operand.vmem [shape: f32[16,8], index: 0, kind: input, shape index: {}]
  %s1 = inlined_call_operand.vmem [shape: f32[16,8], index: 1, kind: input, shape index: {}]
  %s2 = inlined_call_operand.vmem [shape: f32[33,1], index: 2, kind: input, shape index: {}]
  %s3 = inlined_call_operand.hbm [shape: f32[1,8], index: 3, kind: output, shape index: {}]
  %s4 = sld [smem:[#allocation0]]
  $region22: #{simplenet_forward.1} parent=0
    _
  %s6 = ssub.s32 1, %s4
  %s7 = scalar_select 0, %s6, %s4
  $region1: #{simplenet_forward.1} parent=0
    #allocation2 [shape = 'u8[512]{0}', space=vmem, size = 0x400, scoped, tag = 'output window, operand 0, single buffered']
    #allocation3 [shape = 's32[1]{0}', space=sflag, size = 0x4, scoped, tag = 'scoped memory for simplenet_forward.1']
    %8 = vsyncpa [#allocation3], 0
    // Predicated region
    $region2: #{simplenet_forward.1} parent=1 // pred_check
      _
    $region3: #{simplenet_forward.1} parent=1 // pred_check_branch
      %10 = sbr.rel (0) target = $region5
    $region4: #{simplenet_forward.1} parent=1 // pred_region
      _
    $region5: #{simplenet_forward.1} parent=1 // pred_fallthru
      _
    // Predicated region
    $region6: #{simplenet_forward.1} parent=1 // pred_check
      _
    $region7: #{simplenet_forward.1} parent=1 // pred_check_branch
      %12 = sbr.rel (0) target = $region9
    $region8: #{simplenet_forward.1} parent=1 // pred_region
      _
    $region9: #{simplenet_forward.1} parent=1 // pred_fallthru
      _
    // Predicated region
    $region10: #{simplenet_forward.1} parent=1 // pred_check
      _
    $region11: #{simplenet_forward.1} parent=1 // pred_check_branch
      %14 = sbr.rel (0) target = $region13
    $region12: #{simplenet_forward.1} parent=1 // pred_region
      _
    $region13: #{simplenet_forward.1} parent=1 // pred_fallthru
      _
    %v15 = vld [vmem:[%s2] sm:$0xff]
    %v16 = vld [vmem:[%s2 + $0x8] sm:$0xff]
    %v17 = vld [vmem:[%s2 + $0x10] sm:$0xff]
    %v18 = vld [vmem:[%s2 + $0x18] sm:$0xff]
    %v19 = vld [vmem:[%s2 + $0x20] sm:$0x1]
    %v20 = vld [vmem:[%s0] sm:$0xff]
    %v21 = vld [vmem:[%s0 + $0x8] sm:$0xff]
    %23 = vset.pattern.permute.xlu0 0
    %24 = vperm.xlu0 %23, %v15
    %v25 = vpop.permute.xlu0 %24
    %28 = vset.pattern.permute.xlu0 0
    %29 = vperm.xlu0 %28, %v16
    %v30 = vpop.permute.xlu0 %29
    %v32 = vmul.f32 %v20, %v25
    %v33 = vmul.f32 %v21, %v30
    %vm34 = vcmask 64512
    %v35 = vsel %vm34, %v32, 0.0
    %36 = vadd.xlane.f32.xlu0 %v35
    %v37 = vpop.xlane.xlu0 %36
    %v38 = vsel %vm34, %v33, 0.0
    %39 = vadd.xlane.f32.xlu0 %v38
    %v40 = vpop.xlane.xlu0 %39
    %v41 = vadd.f32 %v37, %v40
    %v42 = vrot.slane %v41, 4
    %v43 = vadd.f32 %v41, %v42
    %v44 = vrot.slane %v43, 2
    %v45 = vadd.f32 %v43, %v44
    %v46 = vrot.slane %v45, 1
    %v47 = vadd.f32 %v45, %v46
    %v48 = vld [vmem:[%s1] sm:$0xff]
    %v49 = vld [vmem:[%s1 + $0x8] sm:$0xff]
    %51 = vset.pattern.permute.xlu0 0
    %52 = vperm.xlu0 %51, %v17
    %v53 = vpop.permute.xlu0 %52
    %56 = vset.pattern.permute.xlu0 0
    %57 = vperm.xlu0 %56, %v18
    %v58 = vpop.permute.xlu0 %57
    %v60 = vmul.f32 %v48, %v53
    %v61 = vmul.f32 %v49, %v58
    %v62 = vsel %vm34, %v60, 0.0
    %v63 = vsel %vm34, %v61, 0.0
    %v64 = vadd.f32 %v62, %v63
    %v65 = vrot.slane %v64, 4
    %v66 = vadd.f32 %v64, %v65
    %v67 = vrot.slane %v66, 2
    %v68 = vadd.f32 %v66, %v67
    %v69 = vrot.slane %v68, 1
    %v70 = vadd.f32 %v68, %v69
    %v71 = vadd.f32 %v70, %v47
    %73 = vset.pattern.permute.xlu0 0
    %74 = vperm.xlu0 %73, %v19
    %v75 = vpop.permute.xlu0 %74
    %v77 = vadd.f32 %v71, %v75
    %vm78 = vcmask 57344
    %79 = vst.msk [vmem:[#allocation2] sm:$0x1] %vm78, %v77
    // Predicated region
    $region14: #{simplenet_forward.1} parent=1 // pred_check
      _
    $region15: #{simplenet_forward.1} parent=1 // pred_check_branch
      %81 = sbr.rel (0) target = $region17
    $region16: #{simplenet_forward.1} parent=1 // pred_region
      %s83 = ssub.s32 16, 16
      %84 = vsyncadd [#allocation3], %s83
      %s86 = sshll.u32 [#allocation2], 4
      %s87 = int_to_ptr.vmem [resolvable:$true] %s86
      %89 = dma.vmem_to_hbm [thread:$0]  %s87, 16, %s3, [#allocation3]
    $region17: #{simplenet_forward.1} parent=1 // pred_fallthru
      _
    // Predicated region
    $region18: #{simplenet_forward.1} parent=1 // pred_check
      _
    $region19: #{simplenet_forward.1} parent=1 // pred_check_branch
      %91 = sbr.rel (0) target = $region21
    $region20: #{simplenet_forward.1} parent=1 // pred_region
      %92 = dma.done [#allocation3], 16
    $region21: #{simplenet_forward.1} parent=1 // pred_fallthru
      _
    %93 = vsyncpa [#allocation3], 1

</llo_original>
